<compile_context>
chip_gen: v7x
topology: tpu7x:2x2x1
jax: 0.10.0
libtpu: 0.0.40
codegen_flags: <defaults>
</compile_context>

<pallas_src>
import functools

import jax
import jax.numpy as jnp
from jax.experimental import pallas as pl
from jax.experimental.pallas import tpu as pltpu

LANE = 128


def _round_up(n, m):
    return ((n + m - 1) // m) * m


def _mlp_kernel(*refs, n_layers):
    """Fused MLP forward.

    refs = (x_ref, w0, b0, w1, b1, ..., w{L-1}, b{L-1}, o_ref)
    Weights are bf16 (Din, Dout_pad), biases bf16 (1, Dout_pad), VMEM-resident.
    The running activation stays in f32; it is cast to bf16 only at each MXU
    input, accumulation is f32 (preferred_element_type).
    """
    x_ref = refs[0]
    o_ref = refs[-1]
    h = x_ref[...].astype(jnp.float32)
    for i in range(n_layers):
        w = refs[1 + 2 * i][...]                              # bf16 (Din, Dout_pad)
        b = refs[2 + 2 * i][...].astype(jnp.float32)          # (1, Dout_pad)
        h = jnp.dot(h.astype(jnp.bfloat16), w,
                    preferred_element_type=jnp.float32) + b
        if i < n_layers - 1:                                  # no ReLU on final layer
            h = jnp.maximum(h, 0.0)
    o_ref[...] = h.astype(o_ref.dtype)


def fused_mlp_call(x, weights, biases, batch_tile):
    """One pallas_call for the entire MLP. Batch axis is the (parallel) grid."""
    B, Din = x.shape
    Dout = weights[-1].shape[1]
    n_layers = len(weights)
    assert B % batch_tile == 0
    grid = (B // batch_tile,)

    in_specs = [pl.BlockSpec((batch_tile, Din), lambda i: (i, 0))]
    args = [x]
    for w, b in zip(weights, biases):
        in_specs.append(pl.BlockSpec(w.shape, lambda i: (0, 0)))  # full block
        in_specs.append(pl.BlockSpec(b.shape, lambda i: (0, 0)))  # full block
        args.append(w)
        args.append(b)

    # VMEM budget: params are double-buffered by the default pipeliner even
    # though their block never changes, plus double-buffered x / out tiles.
    param_bytes = sum(int(a.size) * a.dtype.itemsize for a in args[1:])
    act_bytes = 2 * batch_tile * (Din + Dout) * x.dtype.itemsize
    vmem_limit = int(min(max(2 * param_bytes + 2 * act_bytes + (8 << 20),
                             16 << 20), 48 << 20))

    flops = 2 * B * sum(w.shape[0] * w.shape[1] for w in weights)
    bytes_accessed = param_bytes + (B * Din + B * Dout) * x.dtype.itemsize

    return pl.pallas_call(
        functools.partial(_mlp_kernel, n_layers=n_layers),
        out_shape=jax.ShapeDtypeStruct((B, Dout), x.dtype),
        grid=grid,
        in_specs=in_specs,
        # Lane-dense output (Dout padded to 128): keep; narrow slice is outside.
        out_specs=pl.BlockSpec((batch_tile, Dout), lambda i: (i, 0)),
        compiler_params=pltpu.CompilerParams(
            dimension_semantics=("parallel",),   # batch axis: megacore-shardable
            vmem_limit_bytes=vmem_limit,
        ),
        cost_estimate=pl.CostEstimate(
            flops=int(flops), transcendentals=0,
            bytes_accessed=int(bytes_accessed)),
    )(*args)


def init_mlp_params(key, sizes):
    """Deterministic init of Linear layers with PyTorch (out,in) weight shape."""
    params = []
    for i in range(len(sizes) - 1):
        fan_in, fan_out = sizes[i], sizes[i + 1]
        key, kw, kb = jax.random.split(key, 3)
        bound = 1.0 / jnp.sqrt(fan_in)
        w = jax.random.uniform(kw, (fan_out, fan_in), jnp.float32, -bound, bound)
        b = jax.random.uniform(kb, (fan_out,), jnp.float32, -bound, bound)
        params.append((w, b))
    return params


def prepare_params(params, lane=LANE):
    """One-time prep: transpose PyTorch (out,in) weights to (Din, Dout), pad
    Dout to 128 lanes (lane-dense activations/stores).  Layer 0 keeps its true
    Din (so x needs no feature padding); later layers' Din equals the previous
    layer's padded Dout.  Zero rows/cols + zero bias make the padding
    numerically inert (ReLU(0)=0 propagates zeros).  Stored in bf16 to halve
    weight DMA bytes; matmuls accumulate in f32."""
    weights, biases = [], []
    prev_dout_p = None
    for idx, (w, b) in enumerate(params):
        dout, din = w.shape
        din_p = din if idx == 0 else prev_dout_p
        dout_p = _round_up(dout, lane)
        w_p = jnp.zeros((din_p, dout_p), jnp.float32).at[:din, :dout].set(w.T)
        b_p = jnp.zeros((1, dout_p), jnp.float32).at[0, :dout].set(b)
        weights.append(w_p.astype(jnp.bfloat16))
        biases.append(b_p.astype(jnp.bfloat16))
        prev_dout_p = dout_p
    return tuple(weights), tuple(biases)


def _choose_batch_tile(B):
    if B < 16:
        return _round_up(max(B, 1), 8)
    # >= 2 grid steps so the parallel batch axis can shard across v7x's two
    # TensorCores; cap at 512 to fill the MXU M dim on v6e/v7x while keeping
    # the f32 activation tile small (<= 256 KiB).
    return min(512, _round_up((B + 1) // 2, 8))


@functools.partial(jax.jit, static_argnames=("n_outputs",))
def net_forward(x, weights, biases, n_outputs):
    """Equivalent of Net.forward(x, t) for the MLP (non-cifar) configuration.
    Task-offset masking is a no-op when is_cifar=False, so `t` is irrelevant."""
    B, Din = x.shape
    assert Din == weights[0].shape[0], "x feature dim must match layer-0 Din"
    bt = _choose_batch_tile(B)
    B_pad = _round_up(B, bt)
    if B_pad != B:
        # Ragged-tail rows only; zero rows are row-independent and sliced away.
        x = jnp.pad(x, ((0, B_pad - B), (0, 0)))
    out_p = fused_mlp_call(x, weights, biases, bt)
    return out_p[:B, :n_outputs]


def net_forward_ref(x, params):
    h = x
    n_layers = len(params)
    for i, (w, b) in enumerate(params):
        h = h @ w.T + b
        if i < n_layers - 1:
            h = jnp.maximum(h, 0.0)
    return h


if __name__ == "__main__":
    # Small shapes consistent with Net(n_inputs, n_outputs, n_tasks, args)
    # with args.n_layers=2, args.n_hiddens=32 (MLP, non-cifar path).
    batch = 8
    n_inputs = 64
    n_hiddens = 32
    n_layers = 2
    n_outputs = 16
    n_tasks = 4
    nc_per_task = n_outputs  # non-cifar

    key = jax.random.PRNGKey(0)
    key, kx = jax.random.split(key)
    x = jax.random.normal(kx, (batch, n_inputs), dtype=jnp.float32)
    t = 0  # unused in the non-cifar forward (masking is a no-op)

    sizes = [n_inputs] + [n_hiddens] * n_layers + [n_outputs]
    params = init_mlp_params(key, sizes)

    # One-time parameter preparation (transpose + lane padding + bf16 cast).
    weights, biases = prepare_params(params)

    out = net_forward(x, weights, biases, n_outputs)
    out = jax.block_until_ready(out)

    ref = net_forward_ref(x, params)  # f32 reference
    assert out.shape == (batch, n_outputs), out.shape
    # bf16 weights/activations -> loosened tolerance (accumulation is f32).
    assert jnp.allclose(out, ref, atol=3e-2, rtol=3e-2), "mismatch vs reference"

    print("KERNEL_OK")
</pallas_src>

<mosaic_0001>
module attributes {stable_mosaic.version = 11 : i64} {
  func.func @_mlp_kernel(%arg0: i32, %arg1: memref<8x64xf32, #tpu.memory_space<vmem>>, %arg2: memref<64x128xbf16, #tpu.memory_space<vmem>>, %arg3: memref<1x128xbf16, #tpu.memory_space<vmem>>, %arg4: memref<128x128xbf16, #tpu.memory_space<vmem>>, %arg5: memref<1x128xbf16, #tpu.memory_space<vmem>>, %arg6: memref<128x128xbf16, #tpu.memory_space<vmem>>, %arg7: memref<1x128xbf16, #tpu.memory_space<vmem>>, %arg8: memref<8x128xf32, #tpu.memory_space<vmem>>) attributes {dimension_semantics = [#tpu.dimension_semantics<parallel>], iteration_bounds = array<i64: 1>, scalar_prefetch = 0 : i64, scratch_operands = 0 : i64, tpu.core_type = #tpu.core_type<tc>, window_params = [{transform_indices = @transform_0, window_bounds = array<i64: 8, 64>}, {pipeline_mode = #tpu.pipeline_mode<synchronous>, transform_indices = @transform_1, window_bounds = array<i64: 64, 128>}, {pipeline_mode = #tpu.pipeline_mode<synchronous>, transform_indices = @transform_2, window_bounds = array<i64: 1, 128>}, {pipeline_mode = #tpu.pipeline_mode<synchronous>, transform_indices = @transform_3, window_bounds = array<i64: 128, 128>}, {pipeline_mode = #tpu.pipeline_mode<synchronous>, transform_indices = @transform_4, window_bounds = array<i64: 1, 128>}, {pipeline_mode = #tpu.pipeline_mode<synchronous>, transform_indices = @transform_5, window_bounds = array<i64: 128, 128>}, {pipeline_mode = #tpu.pipeline_mode<synchronous>, transform_indices = @transform_6, window_bounds = array<i64: 1, 128>}, {transform_indices = @transform_7, window_bounds = array<i64: 8, 128>}]} {
    %c0 = arith.constant 0 : index
    %c0_0 = arith.constant 0 : index
    %0 = vector.load %arg1[%c0, %c0_0] : memref<8x64xf32, #tpu.memory_space<vmem>>, vector<8x64xf32>
    %c0_1 = arith.constant 0 : index
    %c0_2 = arith.constant 0 : index
    %1 = vector.load %arg2[%c0_1, %c0_2] : memref<64x128xbf16, #tpu.memory_space<vmem>>, vector<64x128xbf16>
    %c0_3 = arith.constant 0 : index
    %c0_4 = arith.constant 0 : index
    %2 = vector.load %arg3[%c0_3, %c0_4] : memref<1x128xbf16, #tpu.memory_space<vmem>>, vector<1x128xbf16>
    %3 = arith.extf %2 : vector<1x128xbf16> to vector<1x128xf32>
    %4 = arith.truncf %0 : vector<8x64xf32> to vector<8x64xbf16>
    %cst = arith.constant dense<0.000000e+00> : vector<8x128xf32>
    %5 = tpu.matmul %4, %1, %cst {dimension_numbers = #tpu.dot_dimension_numbers<[1], [0], [0], [1], [0, 0, 1, 1], [], []>} : vector<8x64xbf16>, vector<64x128xbf16>, vector<8x128xf32> -> vector<8x128xf32>
    %6 = vector.broadcast %3 : vector<1x128xf32> to vector<8x128xf32>
    %7 = arith.addf %5, %6 : vector<8x128xf32>
    %cst_5 = arith.constant 0.000000e+00 : f32
    %8 = vector.broadcast %cst_5 : f32 to vector<8x128xf32>
    %9 = arith.maximumf %7, %8 : vector<8x128xf32>
    %c0_6 = arith.constant 0 : index
    %c0_7 = arith.constant 0 : index
    %10 = vector.load %arg4[%c0_6, %c0_7] : memref<128x128xbf16, #tpu.memory_space<vmem>>, vector<128x128xbf16>
    %c0_8 = arith.constant 0 : index
    %c0_9 = arith.constant 0 : index
    %11 = vector.load %arg5[%c0_8, %c0_9] : memref<1x128xbf16, #tpu.memory_space<vmem>>, vector<1x128xbf16>
    %12 = arith.extf %11 : vector<1x128xbf16> to vector<1x128xf32>
    %13 = arith.truncf %9 : vector<8x128xf32> to vector<8x128xbf16>
    %cst_10 = arith.constant dense<0.000000e+00> : vector<8x128xf32>
    %14 = tpu.matmul %13, %10, %cst_10 {dimension_numbers = #tpu.dot_dimension_numbers<[1], [0], [0], [1], [0, 0, 1, 1], [], []>} : vector<8x128xbf16>, vector<128x128xbf16>, vector<8x128xf32> -> vector<8x128xf32>
    %15 = vector.broadcast %12 : vector<1x128xf32> to vector<8x128xf32>
    %16 = arith.addf %14, %15 : vector<8x128xf32>
    %cst_11 = arith.constant 0.000000e+00 : f32
    %17 = vector.broadcast %cst_11 : f32 to vector<8x128xf32>
    %18 = arith.maximumf %16, %17 : vector<8x128xf32>
    %c0_12 = arith.constant 0 : index
    %c0_13 = arith.constant 0 : index
    %19 = vector.load %arg6[%c0_12, %c0_13] : memref<128x128xbf16, #tpu.memory_space<vmem>>, vector<128x128xbf16>
    %c0_14 = arith.constant 0 : index
    %c0_15 = arith.constant 0 : index
    %20 = vector.load %arg7[%c0_14, %c0_15] : memref<1x128xbf16, #tpu.memory_space<vmem>>, vector<1x128xbf16>
    %21 = arith.extf %20 : vector<1x128xbf16> to vector<1x128xf32>
    %22 = arith.truncf %18 : vector<8x128xf32> to vector<8x128xbf16>
    %cst_16 = arith.constant dense<0.000000e+00> : vector<8x128xf32>
    %23 = tpu.matmul %22, %19, %cst_16 {dimension_numbers = #tpu.dot_dimension_numbers<[1], [0], [0], [1], [0, 0, 1, 1], [], []>} : vector<8x128xbf16>, vector<128x128xbf16>, vector<8x128xf32> -> vector<8x128xf32>
    %24 = vector.broadcast %21 : vector<1x128xf32> to vector<8x128xf32>
    %25 = arith.addf %23, %24 : vector<8x128xf32>
    %c0_17 = arith.constant 0 : index
    %c0_18 = arith.constant 0 : index
    %26 = vector.load %arg8[%c0_17, %c0_18] : memref<8x128xf32, #tpu.memory_space<vmem>>, vector<8x128xf32>
    tpu.vector_store %arg8[%c0_17, %c0_18], %25 {strides = array<i32>} : memref<8x128xf32, #tpu.memory_space<vmem>>, vector<8x128xf32>,
    return
  }
  func.func @transform_0(%arg0: i32) -> (i32, i32) {
    %c0_i32 = arith.constant 0 : i32
    %c0_i32_0 = arith.constant 0 : i32
    return %arg0, %c0_i32 : i32, i32
  }
  func.func @transform_1(%arg0: i32) -> (i32, i32) {
    %c0_i32 = arith.constant 0 : i32
    %c0_i32_0 = arith.constant 0 : i32
    %c0_i32_1 = arith.constant 0 : i32
    return %c0_i32, %c0_i32_0 : i32, i32
  }
  func.func @transform_2(%arg0: i32) -> (i32, i32) {
    %c0_i32 = arith.constant 0 : i32
    %c0_i32_0 = arith.constant 0 : i32
    %c0_i32_1 = arith.constant 0 : i32
    return %c0_i32, %c0_i32_0 : i32, i32
  }
  func.func @transform_3(%arg0: i32) -> (i32, i32) {
    %c0_i32 = arith.constant 0 : i32
    %c0_i32_0 = arith.constant 0 : i32
    %c0_i32_1 = arith.constant 0 : i32
    return %c0_i32, %c0_i32_0 : i32, i32
  }
  func.func @transform_4(%arg0: i32) -> (i32, i32) {
    %c0_i32 = arith.constant 0 : i32
    %c0_i32_0 = arith.constant 0 : i32
    %c0_i32_1 = arith.constant 0 : i32
    return %c0_i32, %c0_i32_0 : i32, i32
  }
  func.func @transform_5(%arg0: i32) -> (i32, i32) {
    %c0_i32 = arith.constant 0 : i32
    %c0_i32_0 = arith.constant 0 : i32
    %c0_i32_1 = arith.constant 0 : i32
    return %c0_i32, %c0_i32_0 : i32, i32
  }
  func.func @transform_6(%arg0: i32) -> (i32, i32) {
    %c0_i32 = arith.constant 0 : i32
    %c0_i32_0 = arith.constant 0 : i32
    %c0_i32_1 = arith.constant 0 : i32
    return %c0_i32, %c0_i32_0 : i32, i32
  }
  func.func @transform_7(%arg0: i32) -> (i32, i32) {
    %c0_i32 = arith.constant 0 : i32
    %c0_i32_0 = arith.constant 0 : i32
    return %arg0, %c0_i32 : i32, i32
  }
}

</mosaic_0001>

<llo_original>
// kernel: net_forward.1
$region0: #{net_forward.1}
  #allocation0 [shape = 'u32[]', space=smem, size = 0x4, offset = 0x4, fixed_abs, tag = 'smem constant byte address 0x4 - core index']
  #allocation1 [shape = 'u32[144,128]{1,0:T(1,128)}', space=vmem, size = 0x12000, scoped, tag = 'internal scratch']
  %s0 = inlined_call_operand.hbm [shape: f32[8,64], index: 0, kind: input, shape index: {}]
  %s1 = inlined_call_operand.hbm [shape: bf16[64,128], index: 1, kind: input, shape index: {}]
  %s2 = inlined_call_operand.vmem [shape: bf16[1,128], index: 2, kind: input, shape index: {}]
  %s3 = inlined_call_operand.hbm [shape: bf16[128,128], index: 3, kind: input, shape index: {}]
  %s4 = inlined_call_operand.vmem [shape: bf16[1,128], index: 4, kind: input, shape index: {}]
  %s5 = inlined_call_operand.hbm [shape: bf16[128,128], index: 5, kind: input, shape index: {}]
  %s6 = inlined_call_operand.vmem [shape: bf16[1,128], index: 6, kind: input, shape index: {}]
  %s7 = inlined_call_operand.hbm [shape: f32[8,128], index: 7, kind: output, shape index: {}]
  %s8 = sld [smem:[#allocation0]]
  $region54: #{net_forward.1} parent=0
    _
  %s10 = ssub.s32 1, %s8
  %s11 = scalar_select 0, %s10, %s8
  $region1: #{net_forward.1} parent=0
    #allocation2 [shape = 'u8[4096]{0}', space=vmem, size = 0x1000, scoped, tag = 'input window, operand 0, single buffered']
    #allocation3 [shape = 's32[1]{0}', space=sflag, size = 0x4, scoped, tag = 'scoped memory for net_forward.1']
    #allocation4 [shape = 's32[1]{0}', space=sflag, size = 0x4, scoped, tag = 'scoped memory for net_forward.1']
    #allocation5 [shape = 'u8[16384]{0}', space=vmem, size = 0x4000, scoped, tag = 'input window, operand 1, single buffered']
    #allocation6 [shape = 's32[1]{0}', space=sflag, size = 0x4, scoped, tag = 'scoped memory for net_forward.1']
    #allocation7 [shape = 'u8[32768]{0}', space=vmem, size = 0x8000, scoped, tag = 'input window, operand 3, single buffered']
    #allocation8 [shape = 'u8[32768]{0}', space=vmem, size = 0x8000, scoped, tag = 'input window, operand 5, single buffered']
    #allocation9 [shape = 's32[1]{0}', space=sflag, size = 0x4, scoped, tag = 'scoped memory for net_forward.1']
    #allocation10 [shape = 'u8[4096]{0}', space=vmem, size = 0x1000, scoped, tag = 'output window, operand 0, single buffered']
    %12 = vsyncpa [#allocation3], 0
    %13 = vsyncpa [#allocation6], 0
    %14 = vsyncpa [#allocation9], 0
    %15 = vsyncpa [#allocation4], 0
    // Predicated region
    $region2: #{net_forward.1} parent=1 // pred_check
      _
    $region3: #{net_forward.1} parent=1 // pred_check_branch
      %17 = sbr.rel (0) target = $region5
    $region4: #{net_forward.1} parent=1 // pred_region
      %s19 = ssub.s32 128, 128
      %20 = vsyncadd [#allocation3], %s19
      %s22 = sshll.u32 [#allocation2], 4
      %s23 = int_to_ptr.vmem [resolvable:$true] %s22
      %25 = dma.hbm_to_vmem [thread:$0]  %s0, 128, %s23, [#allocation3]
    $region5: #{net_forward.1} parent=1 // pred_fallthru
      _
    // Predicated region
    $region6: #{net_forward.1} parent=1 // pred_check
      _
    $region7: #{net_forward.1} parent=1 // pred_check_branch
      %27 = sbr.rel (0) target = $region9
    $region8: #{net_forward.1} parent=1 // pred_region
      %s29 = ssub.s32 512, 512
      %30 = vsyncadd [#allocation6], %s29
      %s31 = sshll.u32 [#allocation5], 4
      %s32 = int_to_ptr.vmem [resolvable:$true] %s31
      %37 = dma.hbm_to_vmem [thread:$0]  %s1, 512, %s32, [#allocation6], 64, 64, 4
    $region9: #{net_forward.1} parent=1 // pred_fallthru
      _
    // Predicated region
    $region10: #{net_forward.1} parent=1 // pred_check
      _
    $region11: #{net_forward.1} parent=1 // pred_check_branch
      %39 = sbr.rel (0) target = $region13
    $region12: #{net_forward.1} parent=1 // pred_region
      _
    $region13: #{net_forward.1} parent=1 // pred_fallthru
      _
    // Predicated region
    $region14: #{net_forward.1} parent=1 // pred_check
      _
    $region15: #{net_forward.1} parent=1 // pred_check_branch
      %41 = sbr.rel (0) target = $region17
    $region16: #{net_forward.1} parent=1 // pred_region
      %s43 = ssub.s32 1024, 1024
      %44 = vsyncadd [#allocation6], %s43
      %s45 = sshll.u32 [#allocation7], 4
      %s46 = int_to_ptr.vmem [resolvable:$true] %s45
      %51 = dma.hbm_to_vmem [thread:$0]  %s3, 1024, %s46, [#allocation6], 64, 64, 4
    $region17: #{net_forward.1} parent=1 // pred_fallthru
      _
    // Predicated region
    $region18: #{net_forward.1} parent=1 // pred_check
      _
    $region19: #{net_forward.1} parent=1 // pred_check_branch
      %53 = sbr.rel (0) target = $region21
    $region20: #{net_forward.1} parent=1 // pred_region
      _
    $region21: #{net_forward.1} parent=1 // pred_fallthru
      _
    // Predicated region
    $region22: #{net_forward.1} parent=1 // pred_check
      _
    $region23: #{net_forward.1} parent=1 // pred_check_branch
      %55 = sbr.rel (0) target = $region25
    $region24: #{net_forward.1} parent=1 // pred_region
      %s57 = ssub.s32 1024, 1024
      %58 = vsyncadd [#allocation9], %s57
      %s59 = sshll.u32 [#allocation8], 4
      %s60 = int_to_ptr.vmem [resolvable:$true] %s59
      %65 = dma.hbm_to_vmem [thread:$0]  %s5, 1024, %s60, [#allocation9], 64, 64, 4
    $region25: #{net_forward.1} parent=1 // pred_fallthru
      _
    // Predicated region
    $region26: #{net_forward.1} parent=1 // pred_check
      _
    $region27: #{net_forward.1} parent=1 // pred_check_branch
      %67 = sbr.rel (0) target = $region29
    $region28: #{net_forward.1} parent=1 // pred_region
      _
    $region29: #{net_forward.1} parent=1 // pred_fallthru
      _
    // Predicated region
    $region30: #{net_forward.1} parent=1 // pred_check
      _
    $region31: #{net_forward.1} parent=1 // pred_check_branch
      %69 = sbr.rel (0) target = $region33
    $region32: #{net_forward.1} parent=1 // pred_region
      %70 = dma.done [#allocation3], 128
    $region33: #{net_forward.1} parent=1 // pred_fallthru
      _
    // Predicated region
    $region34: #{net_forward.1} parent=1 // pred_check
      _
    $region35: #{net_forward.1} parent=1 // pred_check_branch
      %72 = sbr.rel (0) target = $region37
    $region36: #{net_forward.1} parent=1 // pred_region
      %73 = dma.done [#allocation6], 512
    $region37: #{net_forward.1} parent=1 // pred_fallthru
      _
    // Predicated region
    $region38: #{net_forward.1} parent=1 // pred_check
      _
    $region39: #{net_forward.1} parent=1 // pred_check_branch
      %75 = sbr.rel (0) target = $region41
    $region40: #{net_forward.1} parent=1 // pred_region
      %76 = dma.done [#allocation6], 1024
    $region41: #{net_forward.1} parent=1 // pred_fallthru
      _
    // Predicated region
    $region42: #{net_forward.1} parent=1 // pred_check
      _
    $region43: #{net_forward.1} parent=1 // pred_check_branch
      %78 = sbr.rel (0) target = $region45
    $region44: #{net_forward.1} parent=1 // pred_region
      %79 = dma.done [#allocation9], 1024
    $region45: #{net_forward.1} parent=1 // pred_fallthru
      _
    %v81 = vld [vmem:[#allocation2] sm:$0xff]
    %v82 = vld [vmem:[#allocation5] sm:$0xf]
    %v83 = vld [vmem:[#allocation5 + $0x4] sm:$0xf]
    %v84 = vld [vmem:[#allocation5 + $0x8] sm:$0xf]
    %v85 = vld [vmem:[#allocation5 + $0xc] sm:$0xf]
    %v86 = vld [vmem:[#allocation5 + $0x10] sm:$0xf]
    %v87 = vld [vmem:[#allocation5 + $0x14] sm:$0xf]
    %v88 = vld [vmem:[#allocation5 + $0x18] sm:$0xf]
    %v89 = vld [vmem:[#allocation5 + $0x1c] sm:$0xf]
    %v90 = vld [vmem:[%s2] sm:$0x1]
    %v91 = vunpack.c.l.bf16 %v90
    %v92 = vpack.c.bf16 %v81, %v81
    %v93 = vlaneseq
    %v94 = vshrl.u32 %v93, 7
    %v95 = vsub.s32 0, %v94
    %v96 = vrot.slane %v91, %v95
    %v105 = vunpack.c.l.b16 %v82
    %v106 = vunpack.c.l.b16 %v83
    %v107 = vunpack.c.l.b16 %v84
    %v108 = vunpack.c.l.b16 %v85
    %v109 = vunpack.c.l.b16 %v86
    %v110 = vunpack.c.l.b16 %v87
    %v111 = vunpack.c.l.b16 %v88
    %v112 = vunpack.c.l.b16 %v89
    %v113 = vpack.c.b16 %v106, %v105
    %v114 = vpack.c.b16 %v108, %v107
    %v115 = vpack.c.b16 %v110, %v109
    %v116 = vpack.c.b16 %v112, %v111
    %vm121 = vcmask 523264
    %v123 = vsel %vm121, %v92, 0
    %125 = vmatprep.subr.bf16.mxu0 0
    %126 = vmatpush1.bf16.msra.mxu0 %v113
    %127 = vmatprep.subr.bf16.mxu0 0
    %128 = vmatpush1.bf16.msra.mxu0 %v114
    %129 = vmatprep.subr.bf16.mxu0 0
    %130 = vmatpush1.bf16.msra.mxu0 %v115
    %131 = vmatprep.subr.bf16.mxu0 0
    %132 = vmatpush1.bf16.msra.mxu0 %v116
    %133 = vmatprep.subr.bf16.mxu0 0
    %134 = vmatpush1.bf16.msra.mxu0 0
    %135 = vmatprep.subr.bf16.mxu0 0
    %136 = vmatpush1.bf16.msra.mxu0 0
    %137 = vmatprep.subr.bf16.mxu0 0
    %138 = vmatpush1.bf16.msra.mxu0 0
    %139 = vmatprep.subr.bf16.mxu0 0
    %140 = vmatpush1.bf16.msra.mxu0 0
    %141 = vmatprep.subr.bf16.mxu0 0
    %142 = vmatpush1.bf16.msra.mxu0 0
    %143 = vmatprep.subr.bf16.mxu0 0
    %144 = vmatpush1.bf16.msra.mxu0 0
    %145 = vmatprep.subr.bf16.mxu0 0
    %146 = vmatpush1.bf16.msra.mxu0 0
    %147 = vmatprep.subr.bf16.mxu0 0
    %148 = vmatpush1.bf16.msra.mxu0 0
    %149 = vmatprep.subr.bf16.mxu0 0
    %150 = vmatpush1.bf16.msra.mxu0 0
    %151 = vmatprep.subr.bf16.mxu0 0
    %152 = vmatpush1.bf16.msra.mxu0 0
    %153 = vmatprep.subr.bf16.mxu0 0
    %154 = vmatpush1.bf16.msra.mxu0 0
    %155 = vmatprep.subr.bf16.mxu0 0
    %156 = vmatpush1.bf16.msra.mxu0 0
    %157 = vmatprep.mubr.bf16.mxu0 0
    %158 = vmatmul.mubr.bf16.gmra.mrb[0].mxu0 %v123
    %v159 = vpop.f32.mrb[0].mxu0
    %v160 = vadd.f32 %v96, %v159
    %v161 = vpop.f32.mrb[0].mxu0
    %v162 = vpop.f32.mrb[0].mxu0
    %v163 = vpop.f32.mrb[0].mxu0
    %164 = vdwg.mxu0
    %v165 = vmax.f32 %v160, 0.0
    %v166 = vld [vmem:[#allocation7] sm:$0xf]
    %v167 = vld [vmem:[#allocation7 + $0x4] sm:$0xf]
    %v168 = vld [vmem:[#allocation7 + $0x8] sm:$0xf]
    %v169 = vld [vmem:[#allocation7 + $0xc] sm:$0xf]
    %v170 = vld [vmem:[#allocation7 + $0x10] sm:$0xf]
    %v171 = vld [vmem:[#allocation7 + $0x14] sm:$0xf]
    %v172 = vld [vmem:[#allocation7 + $0x18] sm:$0xf]
    %v173 = vld [vmem:[#allocation7 + $0x1c] sm:$0xf]
    %v174 = vld [vmem:[#allocation7 + $0x20] sm:$0xf]
    %v175 = vld [vmem:[#allocation7 + $0x24] sm:$0xf]
    %v176 = vld [vmem:[#allocation7 + $0x28] sm:$0xf]
    %v177 = vld [vmem:[#allocation7 + $0x2c] sm:$0xf]
    %v178 = vld [vmem:[#allocation7 + $0x30] sm:$0xf]
    %v179 = vld [vmem:[#allocation7 + $0x34] sm:$0xf]
    %v180 = vld [vmem:[#allocation7 + $0x38] sm:$0xf]
    %v181 = vld [vmem:[#allocation7 + $0x3c] sm:$0xf]
    %v182 = vld [vmem:[%s4] sm:$0x1]
    %v183 = vunpack.c.l.bf16 %v182
    %v184 = vpack.c.bf16 %v165, %v165
    %v185 = vlaneseq
    %v186 = vshrl.u32 %v185, 7
    %v187 = vsub.s32 0, %v186
    %v188 = vrot.slane %v183, %v187
    %v205 = vunpack.c.l.b16 %v166
    %v206 = vunpack.c.l.b16 %v167
    %v207 = vunpack.c.l.b16 %v168
    %v208 = vunpack.c.l.b16 %v169
    %v209 = vunpack.c.l.b16 %v170
    %v210 = vunpack.c.l.b16 %v171
    %v211 = vunpack.c.l.b16 %v172
    %v212 = vunpack.c.l.b16 %v173
    %v213 = vunpack.c.l.b16 %v174
    %v214 = vunpack.c.l.b16 %v175
    %v215 = vunpack.c.l.b16 %v176
    %v216 = vunpack.c.l.b16 %v177
    %v217 = vunpack.c.l.b16 %v178
    %v218 = vunpack.c.l.b16 %v179
    %v219 = vunpack.c.l.b16 %v180
    %v220 = vunpack.c.l.b16 %v181
    %v221 = vpack.c.b16 %v206, %v205
    %v222 = vpack.c.b16 %v208, %v207
    %v223 = vpack.c.b16 %v210, %v209
    %v224 = vpack.c.b16 %v212, %v211
    %v225 = vpack.c.b16 %v214, %v213
    %v226 = vpack.c.b16 %v216, %v215
    %v227 = vpack.c.b16 %v218, %v217
    %v228 = vpack.c.b16 %v220, %v219
    %237 = vmatprep.subr.bf16.mxu0 0
    %238 = vmatpush1.bf16.msra.mxu0 %v221
    %239 = vmatprep.subr.bf16.mxu0 0
    %240 = vmatpush1.bf16.msra.mxu0 %v222
    %241 = vmatprep.subr.bf16.mxu0 0
    %242 = vmatpush1.bf16.msra.mxu0 %v223
    %243 = vmatprep.subr.bf16.mxu0 0
    %244 = vmatpush1.bf16.msra.mxu0 %v224
    %245 = vmatprep.subr.bf16.mxu0 0
    %246 = vmatpush1.bf16.msra.mxu0 %v225
    %247 = vmatprep.subr.bf16.mxu0 0
    %248 = vmatpush1.bf16.msra.mxu0 %v226
    %249 = vmatprep.subr.bf16.mxu0 0
    %250 = vmatpush1.bf16.msra.mxu0 %v227
    %251 = vmatprep.subr.bf16.mxu0 0
    %252 = vmatpush1.bf16.msra.mxu0 %v228
    %253 = vmatprep.subr.bf16.mxu0 0
    %254 = vmatpush1.bf16.msra.mxu0 0
    %255 = vmatprep.subr.bf16.mxu0 0
    %256 = vmatpush1.bf16.msra.mxu0 0
    %257 = vmatprep.subr.bf16.mxu0 0
    %258 = vmatpush1.bf16.msra.mxu0 0
    %259 = vmatprep.subr.bf16.mxu0 0
    %260 = vmatpush1.bf16.msra.mxu0 0
    %261 = vmatprep.subr.bf16.mxu0 0
    %262 = vmatpush1.bf16.msra.mxu0 0
    %263 = vmatprep.subr.bf16.mxu0 0
    %264 = vmatpush1.bf16.msra.mxu0 0
    %265 = vmatprep.subr.bf16.mxu0 0
    %266 = vmatpush1.bf16.msra.mxu0 0
    %267 = vmatprep.subr.bf16.mxu0 0
    %268 = vmatpush1.bf16.msra.mxu0 0
    %269 = vmatprep.mubr.bf16.mxu0 0
    %270 = vmatmul.mubr.bf16.gmra.mrb[0].mxu0 %v184
    %v271 = vpop.f32.mrb[0].mxu0
    %v272 = vadd.f32 %v188, %v271
    %v273 = vpop.f32.mrb[0].mxu0
    %v274 = vpop.f32.mrb[0].mxu0
    %v275 = vpop.f32.mrb[0].mxu0
    %276 = vdwg.mxu0
    %v277 = vmax.f32 %v272, 0.0
    %v278 = vld [vmem:[#allocation8] sm:$0xf]
    %v279 = vld [vmem:[#allocation8 + $0x4] sm:$0xf]
    %v280 = vld [vmem:[#allocation8 + $0x8] sm:$0xf]
    %v281 = vld [vmem:[#allocation8 + $0xc] sm:$0xf]
    %v282 = vld [vmem:[#allocation8 + $0x10] sm:$0xf]
    %v283 = vld [vmem:[#allocation8 + $0x14] sm:$0xf]
    %v284 = vld [vmem:[#allocation8 + $0x18] sm:$0xf]
    %v285 = vld [vmem:[#allocation8 + $0x1c] sm:$0xf]
    %v286 = vld [vmem:[#allocation8 + $0x20] sm:$0xf]
    %v287 = vld [vmem:[#allocation8 + $0x24] sm:$0xf]
    %v288 = vld [vmem:[#allocation8 + $0x28] sm:$0xf]
    %v289 = vld [vmem:[#allocation8 + $0x2c] sm:$0xf]
    %v290 = vld [vmem:[#allocation8 + $0x30] sm:$0xf]
    %v291 = vld [vmem:[#allocation8 + $0x34] sm:$0xf]
    %v292 = vld [vmem:[#allocation8 + $0x38] sm:$0xf]
    %v293 = vld [vmem:[#allocation8 + $0x3c] sm:$0xf]
    %v294 = vld [vmem:[%s6] sm:$0x1]
    %v295 = vunpack.c.l.bf16 %v294
    %v296 = vpack.c.bf16 %v277, %v277
    %v297 = vlaneseq
    %v298 = vshrl.u32 %v297, 7
    %v299 = vsub.s32 0, %v298
    %v300 = vrot.slane %v295, %v299
    %v317 = vunpack.c.l.b16 %v278
    %v318 = vunpack.c.l.b16 %v279
    %v319 = vunpack.c.l.b16 %v280
    %v320 = vunpack.c.l.b16 %v281
    %v321 = vunpack.c.l.b16 %v282
    %v322 = vunpack.c.l.b16 %v283
    %v323 = vunpack.c.l.b16 %v284
    %v324 = vunpack.c.l.b16 %v285
    %v325 = vunpack.c.l.b16 %v286
    %v326 = vunpack.c.l.b16 %v287
    %v327 = vunpack.c.l.b16 %v288
    %v328 = vunpack.c.l.b16 %v289
    %v329 = vunpack.c.l.b16 %v290
    %v330 = vunpack.c.l.b16 %v291
    %v331 = vunpack.c.l.b16 %v292
    %v332 = vunpack.c.l.b16 %v293
    %v333 = vpack.c.b16 %v318, %v317
    %v334 = vpack.c.b16 %v320, %v319
    %v335 = vpack.c.b16 %v322, %v321
    %v336 = vpack.c.b16 %v324, %v323
    %v337 = vpack.c.b16 %v326, %v325
    %v338 = vpack.c.b16 %v328, %v327
    %v339 = vpack.c.b16 %v330, %v329
    %v340 = vpack.c.b16 %v332, %v331
    %349 = vmatprep.subr.bf16.mxu0 0
    %350 = vmatpush1.bf16.msra.mxu0 %v333
    %351 = vmatprep.subr.bf16.mxu0 0
    %352 = vmatpush1.bf16.msra.mxu0 %v334
    %353 = vmatprep.subr.bf16.mxu0 0
    %354 = vmatpush1.bf16.msra.mxu0 %v335
    %355 = vmatprep.subr.bf16.mxu0 0
    %356 = vmatpush1.bf16.msra.mxu0 %v336
    %357 = vmatprep.subr.bf16.mxu0 0
    %358 = vmatpush1.bf16.msra.mxu0 %v337
    %359 = vmatprep.subr.bf16.mxu0 0
    %360 = vmatpush1.bf16.msra.mxu0 %v338
    %361 = vmatprep.subr.bf16.mxu0 0
    %362 = vmatpush1.bf16.msra.mxu0 %v339
    %363 = vmatprep.subr.bf16.mxu0 0
    %364 = vmatpush1.bf16.msra.mxu0 %v340
    %365 = vmatprep.subr.bf16.mxu0 0
    %366 = vmatpush1.bf16.msra.mxu0 0
    %367 = vmatprep.subr.bf16.mxu0 0
    %368 = vmatpush1.bf16.msra.mxu0 0
    %369 = vmatprep.subr.bf16.mxu0 0
    %370 = vmatpush1.bf16.msra.mxu0 0
    %371 = vmatprep.subr.bf16.mxu0 0
    %372 = vmatpush1.bf16.msra.mxu0 0
    %373 = vmatprep.subr.bf16.mxu0 0
    %374 = vmatpush1.bf16.msra.mxu0 0
    %375 = vmatprep.subr.bf16.mxu0 0
    %376 = vmatpush1.bf16.msra.mxu0 0
    %377 = vmatprep.subr.bf16.mxu0 0
    %378 = vmatpush1.bf16.msra.mxu0 0
    %379 = vmatprep.subr.bf16.mxu0 0
    %380 = vmatpush1.bf16.msra.mxu0 0
    %381 = vmatprep.mubr.bf16.mxu0 0
    %382 = vmatmul.mubr.bf16.gmra.mrb[0].mxu0 %v296
    %v383 = vpop.f32.mrb[0].mxu0
    %v384 = vadd.f32 %v300, %v383
    %v385 = vpop.f32.mrb[0].mxu0
    %v386 = vpop.f32.mrb[0].mxu0
    %v387 = vpop.f32.mrb[0].mxu0
    %388 = vdwg.mxu0
    %389 = vst [vmem:[#allocation10] sm:$0xff] %v384
    // Predicated region
    $region46: #{net_forward.1} parent=1 // pred_check
      _
    $region47: #{net_forward.1} parent=1 // pred_check_branch
      %391 = sbr.rel (0) target = $region49
    $region48: #{net_forward.1} parent=1 // pred_region
      %s393 = ssub.s32 128, 128
      %394 = vsyncadd [#allocation4], %s393
      %s396 = sshll.u32 [#allocation10], 4
      %s397 = int_to_ptr.vmem [resolvable:$true] %s396
      %399 = dma.vmem_to_hbm [thread:$0]  %s397, 128, %s7, [#allocation4]
    $region49: #{net_forward.1} parent=1 // pred_fallthru
      _
    // Predicated region
    $region50: #{net_forward.1} parent=1 // pred_check
      _
    $region51: #{net_forward.1} parent=1 // pred_check_branch
      %401 = sbr.rel (0) target = $region53
    $region52: #{net_forward.1} parent=1 // pred_region
      %402 = dma.done [#allocation4], 128
    $region53: #{net_forward.1} parent=1 // pred_fallthru
      _
    %403 = vsyncpa [#allocation3], 1
    %404 = vsyncpa [#allocation6], 1
    %405 = vsyncpa [#allocation9], 1
    %406 = vsyncpa [#allocation4], 1

</llo_original>
